<compile_context>
chip_gen: v6e
topology: v6e:2x2x1
jax: 0.10.0
libtpu: 0.0.40
codegen_flags: <defaults>
</compile_context>

<pallas_src>
import jax
import jax.numpy as jnp
from jax.experimental import pallas as pl
from jax.experimental.pallas import tpu as pltpu

_LN_EPS = 1e-5  # PyTorch nn.LayerNorm default


def _round_up(x: int, m: int) -> int:
    return ((x + m - 1) // m) * m


def _vmem_capacity_bytes() -> int:
    """Per-TensorCore VMEM capacity; conservative fallback keeps v7x (64 MiB) safe."""
    try:
        return int(pltpu.get_tpu_info().vmem_capacity_bytes)
    except Exception:
        return 64 * 2**20


# --------------------------------------------------------------------------------------
# Kernels
# --------------------------------------------------------------------------------------
def _ffn_resident_kernel(x_ref, w1_ref, b1_ref, w2_ref, b2_ref, g_ref, bt_ref, o_ref):
    """Whole weights resident in VMEM; one grid step per row block."""
    x = x_ref[...]
    # fc1 (+bias) + ReLU. Native dtype into the MXU, f32 accumulate.
    h = jnp.dot(x, w1_ref[...], preferred_element_type=jnp.float32)
    h = jnp.maximum(h + b1_ref[...].astype(jnp.float32), 0.0)
    # fc2 (+bias). Cast activation to the weight dtype (no-op for f32), f32 accumulate.
    y = jnp.dot(h.astype(w2_ref.dtype), w2_ref[...], preferred_element_type=jnp.float32)
    # dropout(p=0) == identity, residual, LayerNorm -- all in f32.
    y = y + b2_ref[...].astype(jnp.float32) + x.astype(jnp.float32)
    mean = jnp.mean(y, axis=-1, keepdims=True)
    c = y - mean
    var = jnp.mean(c * c, axis=-1, keepdims=True)
    out = c * jax.lax.rsqrt(var + _LN_EPS) * g_ref[...].astype(jnp.float32) \
        + bt_ref[...].astype(jnp.float32)
    o_ref[...] = out.astype(o_ref.dtype)


def _ffn_streamed_kernel(x_ref, w1_ref, b1_ref, w2_ref, b2_ref, g_ref, bt_ref,
                         o_ref, acc_ref):
    """Weights streamed over an H-tiled reduction axis; f32 accumulator scratch."""
    hi = pl.program_id(1)

    @pl.when(hi == 0)
    def _init():
        acc_ref[...] = jnp.zeros_like(acc_ref)

    h = jnp.dot(x_ref[...], w1_ref[...], preferred_element_type=jnp.float32)
    h = jnp.maximum(h + b1_ref[...].astype(jnp.float32), 0.0)
    acc_ref[...] += jnp.dot(h.astype(w2_ref.dtype), w2_ref[...],
                            preferred_element_type=jnp.float32)

    @pl.when(hi == pl.num_programs(1) - 1)
    def _finalize():
        y = acc_ref[...] + b2_ref[...].astype(jnp.float32) \
            + x_ref[...].astype(jnp.float32)
        mean = jnp.mean(y, axis=-1, keepdims=True)
        c = y - mean
        var = jnp.mean(c * c, axis=-1, keepdims=True)
        out = c * jax.lax.rsqrt(var + _LN_EPS) * g_ref[...].astype(jnp.float32) \
            + bt_ref[...].astype(jnp.float32)
        o_ref[...] = out.astype(o_ref.dtype)


# --------------------------------------------------------------------------------------
# Wrapper
# --------------------------------------------------------------------------------------
def position_wise_feed_forward(x, w1, b1, w2, b2, gamma, beta, *,
                               block_m=None, block_h=None,
                               weights_resident=None, cast_to_bf16=False):
    """x: [batch, seq, dim_model] -> [batch, seq, dim_model]."""
    B, S, D = x.shape
    H = w1.shape[1]
    M = B * S
    out_dtype = x.dtype

    if cast_to_bf16:
        # Optional mixed precision (changes numerics slightly); accumulation stays f32.
        x = x.astype(jnp.bfloat16)
        w1 = w1.astype(jnp.bfloat16)
        w2 = w2.astype(jnp.bfloat16)

    x2d = x.reshape(M, D)
    itm = x2d.dtype.itemsize
    wtm = w1.dtype.itemsize
    out_itm = jnp.dtype(out_dtype).itemsize
    align = max(8, 32 // itm)  # sublane packing: 8 rows f32, 16 bf16, 32 int8

    vmem_cap = _vmem_capacity_bytes()
    vmem_budget = int(0.75 * vmem_cap)  # leave headroom for compiler scratch

    # ---- VMEM footprint estimates (inputs/outputs double-buffered by Pallas) ----------
    def est_resident_bytes(bm):
        return (2 * bm * D * itm                 # x row block (double-buffered)
                + 2 * bm * D * out_itm           # out row block
                + 2 * 2 * D * H * wtm            # w1 + w2 (assume 2 buffers each)
                + 2 * (H + 3 * D) * 4            # b1, b2, gamma, beta
                + 2 * bm * H * 4                 # fc1 intermediate (f32) + headroom
                + 2 * bm * D * 4)                # f32 residual/LN temporaries

    def est_stream_bytes(bm, bh):
        return (2 * bm * D * itm + 2 * bm * D * out_itm
                + 2 * 2 * D * bh * wtm           # w1/w2 H-slices (double-buffered)
                + 2 * bh * 4 + 2 * 3 * D * 4     # b1 slice + b2/gamma/beta
                + bm * D * 4                     # acc scratch
                + 2 * bm * bh * 4                # fc1 intermediate + headroom
                + bm * D * 4)                    # finalize temporaries

    # ---- Row-block selection (>= 2 blocks when possible so both v7x TCs get work) -----
    def pick_block_m(target):
        bm = min(target, _round_up(M, align))
        bm = _round_up(bm, align)
        mp = _round_up(M, bm)
        while mp // bm < 2 and bm % (2 * align) == 0:
            bm //= 2
            mp = _round_up(M, bm)
        return bm, mp

    # ---- Decide whether the whole weights can stay VMEM-resident ----------------------
    if weights_resident is None:
        bm_probe, _ = pick_block_m(256)
        weights_resident = est_resident_bytes(bm_probe) <= vmem_budget

    if block_m is None:
        block_m, Mp = pick_block_m(256 if weights_resident else 512)
    else:
        block_m = max(align, _round_up(int(block_m), align))
        Mp = _round_up(M, block_m)

    if not weights_resident:
        if block_h is None:
            block_h = min(512, _round_up(H, 128))
        block_h = max(128, _round_up(int(block_h), 128))
        block_h = min(block_h, _round_up(H, 128))
        # Shrink tiles until the streamed footprint fits the budget.
        while est_stream_bytes(block_m, block_h) > vmem_budget and block_h > 128:
            block_h = max(128, block_h // 2)
        while est_stream_bytes(block_m, block_h) > vmem_budget and block_m >= 2 * align:
            block_m = _round_up(block_m // 2, align)
        Mp = _round_up(M, block_m)
        Hp = _round_up(H, block_h)
    else:
        Hp = H

    grid_m = Mp // block_m

    # ---- Pad rows (and the hidden dim in the streamed path) ---------------------------
    if Mp != M:
        x2d = jnp.pad(x2d, ((0, Mp - M), (0, 0)))
    if not weights_resident and Hp != H:
        w1 = jnp.pad(w1, ((0, 0), (0, Hp - H)))
        b1 = jnp.pad(b1, ((0, 0), (0, Hp - H)))
        w2 = jnp.pad(w2, ((0, Hp - H), (0, 0)))

    # ---- Cost estimate (honest HBM byte count) -----------------------------------------
    if weights_resident:
        w_bytes = (2 * D * H + H) * wtm + 3 * D * gamma.dtype.itemsize
        est = est_resident_bytes(block_m)
    else:
        w_bytes = grid_m * (2 * D * Hp + Hp) * wtm + 3 * D * gamma.dtype.itemsize
        est = est_stream_bytes(block_m, block_h)
    cost = pl.CostEstimate(
        flops=4 * M * D * H,
        transcendentals=Mp,  # one rsqrt per row
        bytes_accessed=int(Mp * D * itm + Mp * D * out_itm + w_bytes),
    )
    vmem_limit = int(min(max(int(1.25 * est), 32 * 2**20), int(0.85 * vmem_cap)))

    # ---- Build specs and launch --------------------------------------------------------
    if weights_resident:
        grid = (grid_m,)
        in_specs = [
            pl.BlockSpec((block_m, D), lambda i: (i, 0)),   # x rows
            pl.BlockSpec((D, H), lambda i: (0, 0)),         # w1 (resident, fetched once)
            pl.BlockSpec((1, H), lambda i: (0, 0)),         # b1
            pl.BlockSpec((H, D), lambda i: (0, 0)),         # w2 (resident, fetched once)
            pl.BlockSpec((1, D), lambda i: (0, 0)),         # b2
            pl.BlockSpec((1, D), lambda i: (0, 0)),         # gamma
            pl.BlockSpec((1, D), lambda i: (0, 0)),         # beta
        ]
        out_specs = pl.BlockSpec((block_m, D), lambda i: (i, 0))
        scratch = []
        kernel = _ffn_resident_kernel
        dims = ("parallel",)
    else:
        grid = (grid_m, Hp // block_h)
        in_specs = [
            pl.BlockSpec((block_m, D), lambda i, h: (i, 0)),   # x rows (resident over H)
            pl.BlockSpec((D, block_h), lambda i, h: (0, h)),   # w1 H-slice
            pl.BlockSpec((1, block_h), lambda i, h: (0, h)),   # b1 H-slice
            pl.BlockSpec((block_h, D), lambda i, h: (h, 0)),   # w2 H-slice
            pl.BlockSpec((1, D), lambda i, h: (0, 0)),         # b2
            pl.BlockSpec((1, D), lambda i, h: (0, 0)),         # gamma
            pl.BlockSpec((1, D), lambda i, h: (0, 0)),         # beta
        ]
        out_specs = pl.BlockSpec((block_m, D), lambda i, h: (i, 0))
        scratch = [pltpu.VMEM((block_m, D), jnp.float32)]
        kernel = _ffn_streamed_kernel
        dims = ("parallel", "arbitrary")

    out2d = pl.pallas_call(
        kernel,
        out_shape=jax.ShapeDtypeStruct((Mp, D), out_dtype),
        grid_spec=pltpu.PrefetchScalarGridSpec(
            num_scalar_prefetch=0,
            grid=grid,
            in_specs=in_specs,
            out_specs=out_specs,
            scratch_shapes=scratch,
        ),
        compiler_params=pltpu.CompilerParams(
            dimension_semantics=dims,
            vmem_limit_bytes=vmem_limit,
        ),
        cost_estimate=cost,
    )(x2d, w1, b1, w2, b2, gamma, beta)

    if Mp != M:
        out2d = out2d[:M]
    return out2d.reshape(B, S, D)


# --------------------------------------------------------------------------------------
# Reference + test harness
# --------------------------------------------------------------------------------------
def _reference(x, w1, b1, w2, b2, gamma, beta):
    h = jnp.maximum(x @ w1 + b1[0], 0.0)
    y = h @ w2 + b2[0]
    y = y + x
    mean = jnp.mean(y, axis=-1, keepdims=True)
    var = jnp.mean((y - mean) ** 2, axis=-1, keepdims=True)
    return (y - mean) * jax.lax.rsqrt(var + _LN_EPS) * gamma[0] + beta[0]


def _make_params(key, dim_model, hidden, dtype):
    k1, k2, k3, k4 = jax.random.split(key, 4)
    w1 = jax.random.normal(k1, (dim_model, hidden), dtype=dtype) * (dim_model ** -0.5)
    b1 = jax.random.normal(k2, (1, hidden), dtype=dtype) * 0.01
    w2 = jax.random.normal(k3, (hidden, dim_model), dtype=dtype) * (hidden ** -0.5)
    b2 = jax.random.normal(k4, (1, dim_model), dtype=dtype) * 0.01
    gamma = jnp.ones((1, dim_model), dtype=dtype)   # LayerNorm weight init
    beta = jnp.zeros((1, dim_model), dtype=dtype)   # LayerNorm bias init
    return w1, b1, w2, b2, gamma, beta


if __name__ == "__main__":
    key = jax.random.PRNGKey(0)

    # --- Test 1: small shapes consistent with the module (resident-weight fast path). ---
    batch, seq, dim_model, hidden = 2, 8, 32, 64
    kx, kp = jax.random.split(key)
    x = jax.random.normal(kx, (batch, seq, dim_model), dtype=jnp.float32)
    params = _make_params(kp, dim_model, hidden, jnp.float32)

    out = jax.block_until_ready(position_wise_feed_forward(x, *params))
    ref = _reference(x, *params)
    assert out.shape == (batch, seq, dim_model)
    err1 = float(jnp.max(jnp.abs(out - ref)))
    # Tolerance accommodates TPU matmul precision differences between Pallas and XLA.
    assert err1 < 2e-2, f"test1 max abs err {err1}"

    # --- Test 2: streamed path with row padding (M=144 -> 192) and H padding (200->256). -
    batch2, seq2, dim_model2, hidden2 = 2, 72, 128, 200
    kx2, kp2 = jax.random.split(jax.random.PRNGKey(1))
    x2 = jax.random.normal(kx2, (batch2, seq2, dim_model2), dtype=jnp.float32)
    params2 = _make_params(kp2, dim_model2, hidden2, jnp.float32)

    out2 = jax.block_until_ready(position_wise_feed_forward(
        x2, *params2, block_m=64, block_h=128, weights_resident=False))
    ref2 = _reference(x2, *params2)
    assert out2.shape == (batch2, seq2, dim_model2)
    err2 = float(jnp.max(jnp.abs(out2 - ref2)))
    assert err2 < 2e-2, f"test2 max abs err {err2}"

    print("KERNEL_OK")
</pallas_src>

<mosaic_0001>
module attributes {stable_mosaic.version = 11 : i64} {
  func.func @_ffn_resident_kernel(%arg0: i32, %arg1: memref<8x32xf32, #tpu.memory_space<vmem>>, %arg2: memref<32x64xf32, #tpu.memory_space<vmem>>, %arg3: memref<1x64xf32, #tpu.memory_space<vmem>>, %arg4: memref<64x32xf32, #tpu.memory_space<vmem>>, %arg5: memref<1x32xf32, #tpu.memory_space<vmem>>, %arg6: memref<1x32xf32, #tpu.memory_space<vmem>>, %arg7: memref<1x32xf32, #tpu.memory_space<vmem>>, %arg8: memref<8x32xf32, #tpu.memory_space<vmem>>) attributes {dimension_semantics = [#tpu.dimension_semantics<parallel>], iteration_bounds = array<i64: 2>, scalar_prefetch = 0 : i64, scratch_operands = 0 : i64, tpu.core_type = #tpu.core_type<tc>, window_params = [{transform_indices = @transform_0, window_bounds = array<i64: 8, 32>}, {pipeline_mode = #tpu.pipeline_mode<synchronous>, transform_indices = @transform_1, window_bounds = array<i64: 32, 64>}, {pipeline_mode = #tpu.pipeline_mode<synchronous>, transform_indices = @transform_2, window_bounds = array<i64: 1, 64>}, {pipeline_mode = #tpu.pipeline_mode<synchronous>, transform_indices = @transform_3, window_bounds = array<i64: 64, 32>}, {pipeline_mode = #tpu.pipeline_mode<synchronous>, transform_indices = @transform_4, window_bounds = array<i64: 1, 32>}, {pipeline_mode = #tpu.pipeline_mode<synchronous>, transform_indices = @transform_5, window_bounds = array<i64: 1, 32>}, {pipeline_mode = #tpu.pipeline_mode<synchronous>, transform_indices = @transform_6, window_bounds = array<i64: 1, 32>}, {transform_indices = @transform_7, window_bounds = array<i64: 8, 32>}]} {
    %c0 = arith.constant 0 : index
    %c0_0 = arith.constant 0 : index
    %0 = vector.load %arg1[%c0, %c0_0] : memref<8x32xf32, #tpu.memory_space<vmem>>, vector<8x32xf32>
    %c0_1 = arith.constant 0 : index
    %c0_2 = arith.constant 0 : index
    %1 = vector.load %arg2[%c0_1, %c0_2] : memref<32x64xf32, #tpu.memory_space<vmem>>, vector<32x64xf32>
    %cst = arith.constant dense<0.000000e+00> : vector<8x64xf32>
    %2 = tpu.matmul %0, %1, %cst {dimension_numbers = #tpu.dot_dimension_numbers<[1], [0], [0], [1], [0, 0, 1, 1], [], []>} : vector<8x32xf32>, vector<32x64xf32>, vector<8x64xf32> -> vector<8x64xf32>
    %c0_3 = arith.constant 0 : index
    %c0_4 = arith.constant 0 : index
    %3 = vector.load %arg3[%c0_3, %c0_4] : memref<1x64xf32, #tpu.memory_space<vmem>>, vector<1x64xf32>
    %4 = vector.broadcast %3 : vector<1x64xf32> to vector<8x64xf32>
    %5 = arith.addf %2, %4 : vector<8x64xf32>
    %cst_5 = arith.constant 0.000000e+00 : f32
    %6 = vector.broadcast %cst_5 : f32 to vector<8x64xf32>
    %7 = arith.maximumf %5, %6 : vector<8x64xf32>
    %c0_6 = arith.constant 0 : index
    %c0_7 = arith.constant 0 : index
    %8 = vector.load %arg4[%c0_6, %c0_7] : memref<64x32xf32, #tpu.memory_space<vmem>>, vector<64x32xf32>
    %cst_8 = arith.constant dense<0.000000e+00> : vector<8x32xf32>
    %9 = tpu.matmul %7, %8, %cst_8 {dimension_numbers = #tpu.dot_dimension_numbers<[1], [0], [0], [1], [0, 0, 1, 1], [], []>} : vector<8x64xf32>, vector<64x32xf32>, vector<8x32xf32> -> vector<8x32xf32>
    %c0_9 = arith.constant 0 : index
    %c0_10 = arith.constant 0 : index
    %10 = vector.load %arg5[%c0_9, %c0_10] : memref<1x32xf32, #tpu.memory_space<vmem>>, vector<1x32xf32>
    %11 = vector.broadcast %10 : vector<1x32xf32> to vector<8x32xf32>
    %12 = arith.addf %9, %11 : vector<8x32xf32>
    %13 = arith.addf %12, %0 : vector<8x32xf32>
    %cst_11 = arith.constant dense<0.000000e+00> : vector<8xf32>
    %14 = vector.multi_reduction <add>, %13, %cst_11 [1] : vector<8x32xf32> to vector<8xf32>
    %15 = vector.shape_cast %14 : vector<8xf32> to vector<8x1xf32>
    %cst_12 = arith.constant 3.200000e+01 : f32
    %16 = vector.broadcast %cst_12 : f32 to vector<8x1xf32>
    %17 = arith.divf %15, %16 : vector<8x1xf32>
    %18 = vector.broadcast %17 : vector<8x1xf32> to vector<8x32xf32>
    %19 = arith.subf %13, %18 : vector<8x32xf32>
    %20 = arith.mulf %19, %19 : vector<8x32xf32>
    %cst_13 = arith.constant dense<0.000000e+00> : vector<8xf32>
    %21 = vector.multi_reduction <add>, %20, %cst_13 [1] : vector<8x32xf32> to vector<8xf32>
    %22 = vector.shape_cast %21 : vector<8xf32> to vector<8x1xf32>
    %cst_14 = arith.constant 3.200000e+01 : f32
    %23 = vector.broadcast %cst_14 : f32 to vector<8x1xf32>
    %24 = arith.divf %22, %23 : vector<8x1xf32>
    %cst_15 = arith.constant 9.99999974E-6 : f32
    %25 = vector.broadcast %cst_15 : f32 to vector<8x1xf32>
    %26 = arith.addf %24, %25 : vector<8x1xf32>
    %27 = math.rsqrt %26 : vector<8x1xf32>
    %28 = vector.broadcast %27 : vector<8x1xf32> to vector<8x32xf32>
    %29 = arith.mulf %19, %28 : vector<8x32xf32>
    %c0_16 = arith.constant 0 : index
    %c0_17 = arith.constant 0 : index
    %30 = vector.load %arg6[%c0_16, %c0_17] : memref<1x32xf32, #tpu.memory_space<vmem>>, vector<1x32xf32>
    %31 = vector.broadcast %30 : vector<1x32xf32> to vector<8x32xf32>
    %32 = arith.mulf %29, %31 : vector<8x32xf32>
    %c0_18 = arith.constant 0 : index
    %c0_19 = arith.constant 0 : index
    %33 = vector.load %arg7[%c0_18, %c0_19] : memref<1x32xf32, #tpu.memory_space<vmem>>, vector<1x32xf32>
    %34 = vector.broadcast %33 : vector<1x32xf32> to vector<8x32xf32>
    %35 = arith.addf %32, %34 : vector<8x32xf32>
    %c0_20 = arith.constant 0 : index
    %c0_21 = arith.constant 0 : index
    %36 = vector.load %arg8[%c0_20, %c0_21] : memref<8x32xf32, #tpu.memory_space<vmem>>, vector<8x32xf32>
    tpu.vector_store %arg8[%c0_20, %c0_21], %35 {strides = array<i32>} : memref<8x32xf32, #tpu.memory_space<vmem>>, vector<8x32xf32>,
    return
  }
  func.func @transform_0(%arg0: i32) -> (i32, i32) {
    %c0_i32 = arith.constant 0 : i32
    %c0_i32_0 = arith.constant 0 : i32
    return %arg0, %c0_i32 : i32, i32
  }
  func.func @transform_1(%arg0: i32) -> (i32, i32) {
    %c0_i32 = arith.constant 0 : i32
    %c0_i32_0 = arith.constant 0 : i32
    %c0_i32_1 = arith.constant 0 : i32
    return %c0_i32, %c0_i32_0 : i32, i32
  }
  func.func @transform_2(%arg0: i32) -> (i32, i32) {
    %c0_i32 = arith.constant 0 : i32
    %c0_i32_0 = arith.constant 0 : i32
    %c0_i32_1 = arith.constant 0 : i32
    return %c0_i32, %c0_i32_0 : i32, i32
  }
  func.func @transform_3(%arg0: i32) -> (i32, i32) {
    %c0_i32 = arith.constant 0 : i32
    %c0_i32_0 = arith.constant 0 : i32
    %c0_i32_1 = arith.constant 0 : i32
    return %c0_i32, %c0_i32_0 : i32, i32
  }
  func.func @transform_4(%arg0: i32) -> (i32, i32) {
    %c0_i32 = arith.constant 0 : i32
    %c0_i32_0 = arith.constant 0 : i32
    %c0_i32_1 = arith.constant 0 : i32
    return %c0_i32, %c0_i32_0 : i32, i32
  }
  func.func @transform_5(%arg0: i32) -> (i32, i32) {
    %c0_i32 = arith.constant 0 : i32
    %c0_i32_0 = arith.constant 0 : i32
    %c0_i32_1 = arith.constant 0 : i32
    return %c0_i32, %c0_i32_0 : i32, i32
  }
  func.func @transform_6(%arg0: i32) -> (i32, i32) {
    %c0_i32 = arith.constant 0 : i32
    %c0_i32_0 = arith.constant 0 : i32
    %c0_i32_1 = arith.constant 0 : i32
    return %c0_i32, %c0_i32_0 : i32, i32
  }
  func.func @transform_7(%arg0: i32) -> (i32, i32) {
    %c0_i32 = arith.constant 0 : i32
    %c0_i32_0 = arith.constant 0 : i32
    return %arg0, %c0_i32 : i32, i32
  }
}

</mosaic_0001>

<llo_original>
// kernel: tpu_custom_call.1
$region0: #{tpu_custom_call.1}
  #allocation0 [shape = 'u32[]', space=smem, size = 0x4, offset = 0x4, fixed_abs, tag = 'smem constant byte address 0x4 - core index']
  #allocation1 [shape = 'u32[144,128]{1,0:T(1,128)}', space=vmem, size = 0x12000, scoped, tag = 'internal scratch']
  %s0 = inlined_call_operand.vmem [shape: f32[16,32], index: 0, kind: input, shape index: {}]
  %s1 = inlined_call_operand.vmem [shape: f32[32,64], index: 1, kind: input, shape index: {}]
  %s2 = inlined_call_operand.vmem [shape: f32[1,64], index: 2, kind: input, shape index: {}]
  %s3 = inlined_call_operand.vmem [shape: f32[64,32], index: 3, kind: input, shape index: {}]
  %s4 = inlined_call_operand.vmem [shape: f32[1,32], index: 4, kind: input, shape index: {}]
  %s5 = inlined_call_operand.vmem [shape: f32[1,32], index: 5, kind: input, shape index: {}]
  %s6 = inlined_call_operand.vmem [shape: f32[1,32], index: 6, kind: input, shape index: {}]
  %s7 = inlined_call_operand.hbm [shape: f32[16,32], index: 7, kind: output, shape index: {}]
  %s8 = sld [smem:[#allocation0]]
  $region61: #{tpu_custom_call.1} parent=0
    _
  %s10 = ssub.s32 1, %s8
  %s11 = scalar_select 0, %s10, %s8
  $region1: #{tpu_custom_call.1} parent=0
    #allocation2 [shape = 'u8[8192]{0}', space=vmem, size = 0x2000, scoped, tag = 'output window, operand 0']
    #allocation3 [shape = 's32[2]{0}', space=sflag, size = 0x8, scoped, tag = 'scoped memory for tpu_custom_call.1']
    %12 = vsyncpa [#allocation3], 0
    %s13 = scalar_lea.sflag [#allocation3], 1
    %14 = vsyncpa %s13, 0
    loop: start=0, step=1, limit=4
    $region2: #{tpu_custom_call.1} parent=1 // loop_pre_header
      _
    $region3: #{tpu_custom_call.1} parent=1 // loop_header
      %s16 = sphi 0, %s20
      %p17 = scmp.ge.s32.totalorder %s16, 4
      %s26 = sphi 0, %s28
      %s29 = sphi 0, %s26
      %s30 = sphi 0, %s29
      %s46 = sphi 0, %s30
      %s50 = sphi 0, %s50
      %s52 = sphi 0, %s50
      %s53 = sphi 0, %s52
      %s67 = sphi 0, %s53
      %s71 = sphi 0, %s71
      %s73 = sphi 0, %s71
      %s74 = sphi 0, %s73
      %s88 = sphi 0, %s74
      %s92 = sphi 0, %s92
      %s94 = sphi 0, %s92
      %s95 = sphi 0, %s94
      %s109 = sphi 0, %s95
      %s113 = sphi 0, %s113
      %s115 = sphi 0, %s113
      %s116 = sphi 0, %s115
      %s130 = sphi 0, %s116
      %s134 = sphi 0, %s134
      %s136 = sphi 0, %s134
      %s137 = sphi 0, %s136
      %s151 = sphi 0, %s137
      %s155 = sphi 0, %s155
      %s157 = sphi 0, %s155
      %s158 = sphi 0, %s157
      %s172 = sphi 0, %s158
      %s178 = sphi 0, %s180
      %s181 = sphi 0, %s178
      %s182 = sphi 0, %s181
      %s198 = sphi 0, %s182
    $region4: #{tpu_custom_call.1} parent=1 // loop_header_branch
      %19 = sbr.rel (%p17) target = $region8
    $region5: #{tpu_custom_call.1} parent=1 // loop_body
      %s21 = ssub.s32 %s16, 1
      %s22 = ssub.s32 %s16, 2
      %s23 = sadd.s32 %s16, 1
      %s24 = ssub.s32 %s16, %s23
      %p25 = scmp.eq.s32.totalorder %s24, 0
      %s27 = sadd.s32 %s26, 1
      %s28 = scalar_select %p25, %s26, %s27
      %p31 = pneg %p25
      %p32 = scmp.eq.s32.totalorder %s16, 1
      %p33 = por %p31, %p32
      %p34 = scmp.ne.s32.totalorder %s26, %s29
      %p35 = scmp.eq.s32.totalorder %s16, 0
      %p36 = por %p34, %p35
      %p37 = scmp.ne.s32.totalorder %s26, %s29
      %p38 = scmp.eq.s32.totalorder %s21, 1
      %p39 = por %p37, %p38
      %p40 = scmp.ne.s32.totalorder %s29, %s30
      %p41 = scmp.eq.s32.totalorder %s21, 0
      %p42 = por %p40, %p41
      %p43 = scmp.ne.s32.totalorder %s29, %s30
      %p44 = scmp.eq.s32.totalorder %s22, 1
      %p45 = por %p43, %p44
      %p47 = scmp.ne.s32.totalorder %s30, %s46
      %p48 = scmp.eq.s32.totalorder %s22, 0
      %p49 = por %p47, %p48
      %s51 = sadd.s32 %s50, 1
      %p54 = scmp.eq.s32.totalorder %s16, 1
      %p55 = scmp.ne.s32.totalorder %s50, %s52
      %p56 = scmp.eq.s32.totalorder %s16, 0
      %p57 = por %p55, %p56
      %p58 = scmp.ne.s32.totalorder %s50, %s52
      %p59 = scmp.eq.s32.totalorder %s21, 1
      %p60 = por %p58, %p59
      %p61 = scmp.ne.s32.totalorder %s52, %s53
      %p62 = scmp.eq.s32.totalorder %s21, 0
      %p63 = por %p61, %p62
      %p64 = scmp.ne.s32.totalorder %s52, %s53
      %p65 = scmp.eq.s32.totalorder %s22, 1
      %p66 = por %p64, %p65
      %p68 = scmp.ne.s32.totalorder %s53, %s67
      %p69 = scmp.eq.s32.totalorder %s22, 0
      %p70 = por %p68, %p69
      %s72 = sadd.s32 %s71, 1
      %p75 = scmp.eq.s32.totalorder %s16, 1
      %p76 = scmp.ne.s32.totalorder %s71, %s73
      %p77 = scmp.eq.s32.totalorder %s16, 0
      %p78 = por %p76, %p77
      %p79 = scmp.ne.s32.totalorder %s71, %s73
      %p80 = scmp.eq.s32.totalorder %s21, 1
      %p81 = por %p79, %p80
      %p82 = scmp.ne.s32.totalorder %s73, %s74
      %p83 = scmp.eq.s32.totalorder %s21, 0
      %p84 = por %p82, %p83
      %p85 = scmp.ne.s32.totalorder %s73, %s74
      %p86 = scmp.eq.s32.totalorder %s22, 1
      %p87 = por %p85, %p86
      %p89 = scmp.ne.s32.totalorder %s74, %s88
      %p90 = scmp.eq.s32.totalorder %s22, 0
      %p91 = por %p89, %p90
      %s93 = sadd.s32 %s92, 1
      %p96 = scmp.eq.s32.totalorder %s16, 1
      %p97 = scmp.ne.s32.totalorder %s92, %s94
      %p98 = scmp.eq.s32.totalorder %s16, 0
      %p99 = por %p97, %p98
      %p100 = scmp.ne.s32.totalorder %s92, %s94
      %p101 = scmp.eq.s32.totalorder %s21, 1
      %p102 = por %p100, %p101
      %p103 = scmp.ne.s32.totalorder %s94, %s95
      %p104 = scmp.eq.s32.totalorder %s21, 0
      %p105 = por %p103, %p104
      %p106 = scmp.ne.s32.totalorder %s94, %s95
      %p107 = scmp.eq.s32.totalorder %s22, 1
      %p108 = por %p106, %p107
      %p110 = scmp.ne.s32.totalorder %s95, %s109
      %p111 = scmp.eq.s32.totalorder %s22, 0
      %p112 = por %p110, %p111
      %s114 = sadd.s32 %s113, 1
      %p117 = scmp.eq.s32.totalorder %s16, 1
      %p118 = scmp.ne.s32.totalorder %s113, %s115
      %p119 = scmp.eq.s32.totalorder %s16, 0
      %p120 = por %p118, %p119
      %p121 = scmp.ne.s32.totalorder %s113, %s115
      %p122 = scmp.eq.s32.totalorder %s21, 1
      %p123 = por %p121, %p122
      %p124 = scmp.ne.s32.totalorder %s115, %s116
      %p125 = scmp.eq.s32.totalorder %s21, 0
      %p126 = por %p124, %p125
      %p127 = scmp.ne.s32.totalorder %s115, %s116
      %p128 = scmp.eq.s32.totalorder %s22, 1
      %p129 = por %p127, %p128
      %p131 = scmp.ne.s32.totalorder %s116, %s130
      %p132 = scmp.eq.s32.totalorder %s22, 0
      %p133 = por %p131, %p132
      %s135 = sadd.s32 %s134, 1
      %p138 = scmp.eq.s32.totalorder %s16, 1
      %p139 = scmp.ne.s32.totalorder %s134, %s136
      %p140 = scmp.eq.s32.totalorder %s16, 0
      %p141 = por %p139, %p140
      %p142 = scmp.ne.s32.totalorder %s134, %s136
      %p143 = scmp.eq.s32.totalorder %s21, 1
      %p144 = por %p142, %p143
      %p145 = scmp.ne.s32.totalorder %s136, %s137
      %p146 = scmp.eq.s32.totalorder %s21, 0
      %p147 = por %p145, %p146
      %p148 = scmp.ne.s32.totalorder %s136, %s137
      %p149 = scmp.eq.s32.totalorder %s22, 1
      %p150 = por %p148, %p149
      %p152 = scmp.ne.s32.totalorder %s137, %s151
      %p153 = scmp.eq.s32.totalorder %s22, 0
      %p154 = por %p152, %p153
      %s156 = sadd.s32 %s155, 1
      %p159 = scmp.eq.s32.totalorder %s16, 1
      %p160 = scmp.ne.s32.totalorder %s155, %s157
      %p161 = scmp.eq.s32.totalorder %s16, 0
      %p162 = por %p160, %p161
      %p163 = scmp.ne.s32.totalorder %s155, %s157
      %p164 = scmp.eq.s32.totalorder %s21, 1
      %p165 = por %p163, %p164
      %p166 = scmp.ne.s32.totalorder %s157, %s158
      %p167 = scmp.eq.s32.totalorder %s21, 0
      %p168 = por %p166, %p167
      %p169 = scmp.ne.s32.totalorder %s157, %s158
      %p170 = scmp.eq.s32.totalorder %s22, 1
      %p171 = por %p169, %p170
      %p173 = scmp.ne.s32.totalorder %s158, %s172
      %p174 = scmp.eq.s32.totalorder %s22, 0
      %p175 = por %p173, %p174
      %s176 = ssub.s32 %s16, %s23
      %p177 = scmp.eq.s32.totalorder %s176, 0
      %s179 = sadd.s32 %s178, 1
      %s180 = scalar_select %p177, %s178, %s179
      %p183 = pneg %p177
      %p184 = scmp.eq.s32.totalorder %s16, 1
      %p185 = por %p183, %p184
      %p186 = scmp.ne.s32.totalorder %s178, %s181
      %p187 = scmp.eq.s32.totalorder %s16, 0
      %p188 = por %p186, %p187
      %p189 = scmp.ne.s32.totalorder %s178, %s181
      %p190 = scmp.eq.s32.totalorder %s21, 1
      %p191 = por %p189, %p190
      %p192 = scmp.ne.s32.totalorder %s181, %s182
      %p193 = scmp.eq.s32.totalorder %s21, 0
      %p194 = por %p192, %p193
      %p195 = scmp.ne.s32.totalorder %s181, %s182
      %p196 = scmp.eq.s32.totalorder %s22, 1
      %p197 = por %p195, %p196
      %p199 = scmp.ne.s32.totalorder %s182, %s198
      %p200 = scmp.eq.s32.totalorder %s22, 0
      %p201 = por %p199, %p200
      %p202 = scmp.le.s32.totalorder 1, %s16
      %p203 = scmp.lt.s32.totalorder %s16, 3
      %p204 = pnand %p202, %p203
      %p205 = pneg %p204
      // Predicated region
      $region9: #{tpu_custom_call.1} parent=5 // pred_check
        _
      $region10: #{tpu_custom_call.1} parent=5 // pred_check_branch
        %207 = sbr.rel (%p204) target = $region12
      $region11: #{tpu_custom_call.1} parent=5 // pred_region
        %s208 = ssub.s32 %s16, 1
        // Predicated region
        $region13: #{tpu_custom_call.1} parent=11 // pred_check
          %p209 = pneg %p63
        $region14: #{tpu_custom_call.1} parent=11 // pred_check_branch
          %211 = sbr.rel (%p209) target = $region16
        $region15: #{tpu_custom_call.1} parent=11 // pred_region
          _
        $region16: #{tpu_custom_call.1} parent=11 // pred_fallthru
          _
        // Predicated region
        $region17: #{tpu_custom_call.1} parent=11 // pred_check
          %p212 = pneg %p84
        $region18: #{tpu_custom_call.1} parent=11 // pred_check_branch
          %214 = sbr.rel (%p212) target = $region20
        $region19: #{tpu_custom_call.1} parent=11 // pred_region
          _
        $region20: #{tpu_custom_call.1} parent=11 // pred_fallthru
          _
        // Predicated region
        $region21: #{tpu_custom_call.1} parent=11 // pred_check
          %p215 = pneg %p105
        $region22: #{tpu_custom_call.1} parent=11 // pred_check_branch
          %217 = sbr.rel (%p215) target = $region24
        $region23: #{tpu_custom_call.1} parent=11 // pred_region
          _
        $region24: #{tpu_custom_call.1} parent=11 // pred_fallthru
          _
        // Predicated region
        $region25: #{tpu_custom_call.1} parent=11 // pred_check
          %p218 = pneg %p126
        $region26: #{tpu_custom_call.1} parent=11 // pred_check_branch
          %220 = sbr.rel (%p218) target = $region28
        $region27: #{tpu_custom_call.1} parent=11 // pred_region
          _
        $region28: #{tpu_custom_call.1} parent=11 // pred_fallthru
          _
        // Predicated region
        $region29: #{tpu_custom_call.1} parent=11 // pred_check
          %p221 = pneg %p147
        $region30: #{tpu_custom_call.1} parent=11 // pred_check_branch
          %223 = sbr.rel (%p221) target = $region32
        $region31: #{tpu_custom_call.1} parent=11 // pred_region
          _
        $region32: #{tpu_custom_call.1} parent=11 // pred_fallthru
          _
        // Predicated region
        $region33: #{tpu_custom_call.1} parent=11 // pred_check
          %p224 = pneg %p168
        $region34: #{tpu_custom_call.1} parent=11 // pred_check_branch
          %226 = sbr.rel (%p224) target = $region36
        $region35: #{tpu_custom_call.1} parent=11 // pred_region
          _
        $region36: #{tpu_custom_call.1} parent=11 // pred_fallthru
          _
      $region12: #{tpu_custom_call.1} parent=5 // pred_fallthru
        _
      %p227 = scmp.lt.s32.totalorder %s16, 2
      // Predicated region
      $region37: #{tpu_custom_call.1} parent=5 // pred_check
        %p228 = pneg %p227
      $region38: #{tpu_custom_call.1} parent=5 // pred_check_branch
        %230 = sbr.rel (%p228) target = $region40
      $region39: #{tpu_custom_call.1} parent=5 // pred_region
        // Predicated region
        $region41: #{tpu_custom_call.1} parent=39 // pred_check
          %p231 = pneg %p36
        $region42: #{tpu_custom_call.1} parent=39 // pred_check_branch
          %233 = sbr.rel (%p231) target = $region44
        $region43: #{tpu_custom_call.1} parent=39 // pred_region
          %p234 = scmp.lt.s32.totalorder %s16, 1
          %s235 = scalar_select %p234, %s16, 1
          %s236 = smul.addr %s235, 8
          %s237 = scalar_lea.vmem %s0, %s236
        $region44: #{tpu_custom_call.1} parent=39 // pred_fallthru
          _
      $region40: #{tpu_custom_call.1} parent=5 // pred_fallthru
        _
      %p238 = scmp.le.s32.totalorder 1, %s16
      %p239 = scmp.lt.s32.totalorder %s16, 3
      %p240 = pnand %p238, %p239
      %p241 = pneg %p240
      // Predicated region
      $region45: #{tpu_custom_call.1} parent=5 // pred_check
        _
      $region46: #{tpu_custom_call.1} parent=5 // pred_check_branch
        %243 = sbr.rel (%p240) target = $region48
      $region47: #{tpu_custom_call.1} parent=5 // pred_region
        %s244 = ssub.s32 %s16, 1
        %p245 = scmp.lt.s32.totalorder %s21, 1
        %s246 = scalar_select %p245, %s21, 1
        %s247 = smul.addr %s246, 8
        %s248 = scalar_lea.vmem %s0, %s247
        %p249 = pneg %p42
        %p250 = pneg %p39
        %p251 = pneg %p63
        %p252 = pneg %p60
        %p253 = pneg %p84
        %p254 = pneg %p81
        %p255 = pneg %p105
        %p256 = pneg %p102
        %p257 = pneg %p126
        %p258 = pneg %p123
        %p259 = pneg %p147
        %p260 = pneg %p144
        %p261 = pneg %p168
        %p262 = pneg %p165
        %p263 = pneg %p194
        %p264 = pneg %p191
        %s265 = sand.u32 %s181, 1
        %s266 = scalar_lea.sflag [#allocation3], %s265
        %s267 = sand.u32 %s181, 1
        %s268 = smul.addr %s267, 8
        %s269 = scalar_lea.vmem [#allocation2], %s268
        %p270 = scmp.lt.s32.totalorder %s21, 1
        %s271 = scalar_select %p270, %s21, 1
        %s272 = smul.addr %s271, 8
        %s273 = scalar_lea.vmem %s0, %s272
        %v274 = vld [vmem:[%s273] sm:$0xff]
        %v275 = vld [vmem:[%s1] sm:$0xff]
        %v276 = vld [vmem:[%s1 + $0x8] sm:$0xff]
        %v277 = vld [vmem:[%s1 + $0x10] sm:$0xff]
        %v278 = vld [vmem:[%s1 + $0x18] sm:$0xff]
        %v279 = vld [vmem:[%s2] sm:$0x1]
        %v281 = vlaneseq
        %v282 = vshrl.u32 %v281, 7
        %v283 = vsub.s32 0, %v282
        %v284 = vrot.slane %v279, %v283
        %vm286 = vcmask 261120
        %v288 = vsel %vm286, %v274, 0
        %290 = vmatprep.subr.mxu0 0.0
        %291 = vmatpush1.msra.mxu0 0.0
        %292 = vmatprep.subr.mxu0 0.0
        %293 = vmatpush1.msra.mxu0 0.0
        %294 = vmatprep.subr.mxu0 0.0
        %295 = vmatpush1.msra.mxu0 0.0
        %296 = vmatprep.subr.mxu0 0.0
        %297 = vmatpush1.msra.mxu0 0.0
        %298 = vmatprep.subr.mxu0 0.0
        %299 = vmatpush1.msra.mxu0 0.0
        %300 = vmatprep.subr.mxu0 0.0
        %301 = vmatpush1.msra.mxu0 0.0
        %302 = vmatprep.subr.mxu0 0.0
        %303 = vmatpush1.msra.mxu0 0.0
        %304 = vmatprep.subr.mxu0 0.0
        %305 = vmatpush1.msra.mxu0 0.0
        %306 = vmatprep.subr.mxu0 0.0
        %307 = vmatpush1.msra.mxu0 0.0
        %308 = vmatprep.subr.mxu0 0.0
        %309 = vmatpush1.msra.mxu0 0.0
        %310 = vmatprep.subr.mxu0 0.0
        %311 = vmatpush1.msra.mxu0 0.0
        %312 = vmatprep.subr.mxu0 0.0
        %313 = vmatpush1.msra.mxu0 0.0
        %314 = vmatprep.subr.mxu0 0.0
        %315 = vmatpush1.msra.mxu0 %v278
        %316 = vmatprep.subr.mxu0 0.0
        %317 = vmatpush1.msra.mxu0 %v277
        %318 = vmatprep.subr.mxu0 0.0
        %319 = vmatpush1.msra.mxu0 %v276
        %320 = vmatprep.subr.mxu0 0.0
        %321 = vmatpush1.msra.mxu0 %v275
        %322 = vmatprep.subr.mxu0 0.0
        %323 = vmatpush2.msra.mxu0 0.0
        %324 = vmatprep.subr.mxu0 0.0
        %325 = vmatpush2.msra.mxu0 0.0
        %326 = vmatprep.subr.mxu0 0.0
        %327 = vmatpush2.msra.mxu0 0.0
        %328 = vmatprep.subr.mxu0 0.0
        %329 = vmatpush2.msra.mxu0 0.0
        %330 = vmatprep.subr.mxu0 0.0
        %331 = vmatpush2.msra.mxu0 0.0
        %332 = vmatprep.subr.mxu0 0.0
        %333 = vmatpush2.msra.mxu0 0.0
        %334 = vmatprep.subr.mxu0 0.0
        %335 = vmatpush2.msra.mxu0 0.0
        %336 = vmatprep.subr.mxu0 0.0
        %337 = vmatpush2.msra.mxu0 0.0
        %338 = vmatprep.subr.mxu0 0.0
        %339 = vmatpush2.msra.mxu0 0.0
        %340 = vmatprep.subr.mxu0 0.0
        %341 = vmatpush2.msra.mxu0 0.0
        %342 = vmatprep.subr.mxu0 0.0
        %343 = vmatpush2.msra.mxu0 0.0
        %344 = vmatprep.subr.mxu0 0.0
        %345 = vmatpush2.msra.mxu0 0.0
        %346 = vmatprep.subr.mxu0 0.0
        %347 = vmatpush2.msra.mxu0 0.0
        %348 = vmatprep.subr.mxu0 0.0
        %349 = vmatpush2.msra.mxu0 0.0
        %350 = vmatprep.subr.mxu0 0.0
        %351 = vmatpush2.msra.mxu0 0.0
        %352 = vmatprep.subr.mxu0 0.0
        %353 = vmatpush2.msra.mxu0 0.0
        %354 = vmatprep.mubr.f32.mxu0 0.0
        %355 = vmatmul.mubr.f32.gmra.mxu0 %v288
        %v356 = vpop.f32.mrf.mxu0
        %v357 = vadd.f32 %v284, %v356
        %v358 = vpop.f32.mrf.mxu0
        %359 = vdwg.mxu0
        %v360 = vmax.f32 %v357, 0.0
        %v361 = vld [vmem:[%s3] sm:$0xff]
        %v362 = vld [vmem:[%s3 + $0x8] sm:$0xff]
        %v363 = vld [vmem:[%s3 + $0x10] sm:$0xff]
        %v364 = vld [vmem:[%s3 + $0x18] sm:$0xff]
        %v365 = vld [vmem:[%s3 + $0x20] sm:$0xff]
        %v366 = vld [vmem:[%s3 + $0x28] sm:$0xff]
        %v367 = vld [vmem:[%s3 + $0x30] sm:$0xff]
        %v368 = vld [vmem:[%s3 + $0x38] sm:$0xff]
        %v369 = vld [vmem:[%s4] sm:$0x1]
        %v371 = vlaneseq
        %v372 = vshrl.u32 %v371, 7
        %v373 = vsub.s32 0, %v372
        %v374 = vrot.slane %v369, %v373
        %vm376 = vcmask 523264
        %v378 = vsel %vm376, %v360, 0
        %380 = vmatprep.subr.mxu0 0.0
        %381 = vmatpush1.msra.mxu0 0.0
        %382 = vmatprep.subr.mxu0 0.0
        %383 = vmatpush1.msra.mxu0 0.0
        %384 = vmatprep.subr.mxu0 0.0
        %385 = vmatpush1.msra.mxu0 0.0
        %386 = vmatprep.subr.mxu0 0.0
        %387 = vmatpush1.msra.mxu0 0.0
        %388 = vmatprep.subr.mxu0 0.0
        %389 = vmatpush1.msra.mxu0 0.0
        %390 = vmatprep.subr.mxu0 0.0
        %391 = vmatpush1.msra.mxu0 0.0
        %392 = vmatprep.subr.mxu0 0.0
        %393 = vmatpush1.msra.mxu0 0.0
        %394 = vmatprep.subr.mxu0 0.0
        %395 = vmatpush1.msra.mxu0 0.0
        %396 = vmatprep.subr.mxu0 0.0
        %397 = vmatpush1.msra.mxu0 %v368
        %398 = vmatprep.subr.mxu0 0.0
        %399 = vmatpush1.msra.mxu0 %v367
        %400 = vmatprep.subr.mxu0 0.0
        %401 = vmatpush1.msra.mxu0 %v366
        %402 = vmatprep.subr.mxu0 0.0
        %403 = vmatpush1.msra.mxu0 %v365
        %404 = vmatprep.subr.mxu0 0.0
        %405 = vmatpush1.msra.mxu0 %v364
        %406 = vmatprep.subr.mxu0 0.0
        %407 = vmatpush1.msra.mxu0 %v363
        %408 = vmatprep.subr.mxu0 0.0
        %409 = vmatpush1.msra.mxu0 %v362
        %410 = vmatprep.subr.mxu0 0.0
        %411 = vmatpush1.msra.mxu0 %v361
        %412 = vmatprep.subr.mxu0 0.0
        %413 = vmatpush2.msra.mxu0 0.0
        %414 = vmatprep.subr.mxu0 0.0
        %415 = vmatpush2.msra.mxu0 0.0
        %416 = vmatprep.subr.mxu0 0.0
        %417 = vmatpush2.msra.mxu0 0.0
        %418 = vmatprep.subr.mxu0 0.0
        %419 = vmatpush2.msra.mxu0 0.0
        %420 = vmatprep.subr.mxu0 0.0
        %421 = vmatpush2.msra.mxu0 0.0
        %422 = vmatprep.subr.mxu0 0.0
        %423 = vmatpush2.msra.mxu0 0.0
        %424 = vmatprep.subr.mxu0 0.0
        %425 = vmatpush2.msra.mxu0 0.0
        %426 = vmatprep.subr.mxu0 0.0
        %427 = vmatpush2.msra.mxu0 0.0
        %428 = vmatprep.subr.mxu0 0.0
        %429 = vmatpush2.msra.mxu0 0.0
        %430 = vmatprep.subr.mxu0 0.0
        %431 = vmatpush2.msra.mxu0 0.0
        %432 = vmatprep.subr.mxu0 0.0
        %433 = vmatpush2.msra.mxu0 0.0
        %434 = vmatprep.subr.mxu0 0.0
        %435 = vmatpush2.msra.mxu0 0.0
        %436 = vmatprep.subr.mxu0 0.0
        %437 = vmatpush2.msra.mxu0 0.0
        %438 = vmatprep.subr.mxu0 0.0
        %439 = vmatpush2.msra.mxu0 0.0
        %440 = vmatprep.subr.mxu0 0.0
        %441 = vmatpush2.msra.mxu0 0.0
        %442 = vmatprep.subr.mxu0 0.0
        %443 = vmatpush2.msra.mxu0 0.0
        %444 = vmatprep.mubr.f32.mxu0 0.0
        %445 = vmatmul.mubr.f32.gmra.mxu0 %v378
        %v446 = vpop.f32.mrf.mxu0
        %v447 = vadd.f32 %v374, %v446
        %v448 = vpop.f32.mrf.mxu0
        %449 = vdwg.mxu0
        %v450 = vadd.f32 %v447, %v274
        %v451 = vsel %vm286, %v450, 0.0
        %452 = vadd.xlane.f32.xlu0 %v451
        %v453 = vpop.xlane.xlu0 %452
        %v454 = vrcp.pop 32.0
        %v455 = vmul.f32 %v453, %v454
        %v456 = vsub.f32 %v450, %v455
        %v457 = vmul.f32 %v456, %v456
        %v458 = vsel %vm286, %v457, 0.0
        %459 = vadd.xlane.f32.xlu0 %v458
        %v460 = vpop.xlane.xlu0 %459
        %v461 = vmul.f32 %v460, %v454
        %v462 = vadd.f32 %v461, 1e-05
        %v463 = vrsqrt.pop %v462
        %v464 = vmul.f32 %v456, %v463
        %v465 = vld [vmem:[%s5] sm:$0x1]
        %v467 = vlaneseq
        %v468 = vshrl.u32 %v467, 7
        %v469 = vsub.s32 0, %v468
        %v470 = vrot.slane %v465, %v469
        %v472 = vmul.f32 %v464, %v470
        %v473 = vld [vmem:[%s6] sm:$0x1]
        %v475 = vlaneseq
        %v476 = vshrl.u32 %v475, 7
        %v477 = vsub.s32 0, %v476
        %v478 = vrot.slane %v473, %v477
        %v480 = vadd.f32 %v472, %v478
        %481 = vst.msk [vmem:[%s269] sm:$0xff] %vm286, %v480
        %s482 = sand.u32 %s181, 1
        %s483 = scalar_lea.sflag [#allocation3], %s482
        %s484 = sand.u32 %s181, 1
        %s485 = smul.addr %s484, 8
        %s486 = scalar_lea.vmem [#allocation2], %s485
        // Predicated region
        $region49: #{tpu_custom_call.1} parent=47 // pred_check
          %p487 = pneg %p191
        $region50: #{tpu_custom_call.1} parent=47 // pred_check_branch
          %489 = sbr.rel (%p487) target = $region52
        $region51: #{tpu_custom_call.1} parent=47 // pred_region
          %s491 = ssub.s32 128, 128
          %492 = vsyncadd %s483, %s491
          %s493 = smul.addr %s21, 128
          %s494 = scalar_lea.hbm %s7, %s493
          %s496 = sshll.u32 %s486, 4
          %s497 = int_to_ptr.vmem [resolvable:$true] %s496
          %499 = dma.vmem_to_hbm [thread:$0]  %s497, 128, %s494, %s483
        $region52: #{tpu_custom_call.1} parent=47 // pred_fallthru
          _
      $region48: #{tpu_custom_call.1} parent=5 // pred_fallthru
        _
      %p500 = scmp.le.s32.totalorder 2, %s16
      // Predicated region
      $region53: #{tpu_custom_call.1} parent=5 // pred_check
        %p501 = pneg %p500
      $region54: #{tpu_custom_call.1} parent=5 // pred_check_branch
        %503 = sbr.rel (%p501) target = $region56
      $region55: #{tpu_custom_call.1} parent=5 // pred_region
        %s504 = ssub.s32 %s16, 2
        // Predicated region
        $region57: #{tpu_custom_call.1} parent=55 // pred_check
          %p505 = pneg %p197
        $region58: #{tpu_custom_call.1} parent=55 // pred_check_branch
          %507 = sbr.rel (%p505) target = $region60
        $region59: #{tpu_custom_call.1} parent=55 // pred_region
          %s508 = sand.u32 %s182, 1
          %s509 = scalar_lea.sflag [#allocation3], %s508
          %s510 = sand.u32 %s182, 1
          %s511 = smul.addr %s510, 8
          %s512 = scalar_lea.vmem [#allocation2], %s511
          %513 = dma.done %s509, 128
        $region60: #{tpu_custom_call.1} parent=55 // pred_fallthru
          _
      $region56: #{tpu_custom_call.1} parent=5 // pred_fallthru
        _
    $region6: #{tpu_custom_call.1} parent=1 // loop_footer
      %s20 = sadd.s32 1, %s16
    $region7: #{tpu_custom_call.1} parent=1 // loop_footer_branch
      %15 = sbr.rel target = $region3
    $region8: #{tpu_custom_call.1} parent=1 // loop_exit
      _
    %514 = vsyncpa [#allocation3], 1
    %s515 = scalar_lea.sflag [#allocation3], 1
    %516 = vsyncpa %s515, 1

</llo_original>
